<compile_context>
chip_gen: v7x
topology: tpu7x:2x2x1
jax: 0.10.0
libtpu: 0.0.40
codegen_flags: <defaults>
</compile_context>

<pallas_src>
import functools

import jax
import jax.numpy as jnp
from jax.experimental import pallas as pl
from jax.experimental.pallas import tpu as pltpu


def _round_up(x, m):
    return ((x + m - 1) // m) * m


def _cat_embed_kernel(idx_ref, emb_ref, gamma_ref, beta_ref, out_ref, *, eps):
    # idx_ref   : (TN, F)    int32  category ids with starts pre-folded
    # emb_ref   : (E_pad, D) bf16   flat embedding table (zero-padded rows)
    # gamma_ref : (1, D)     f32    LayerNorm scale
    # beta_ref  : (1, D)     f32    LayerNorm shift
    # out_ref   : (TN, D)    f32
    idx = idx_ref[...]                                   # (TN, F)
    tn, nfeat = idx.shape
    e_pad = emb_ref.shape[0]

    # One row of table ids; broadcast inside the compare (low vreg pressure).
    eids = jax.lax.broadcasted_iota(jnp.int32, (1, e_pad), 1)      # (1, E_pad)

    # Sum-of-one-hots count matrix.  Accumulate in f32 (native VALU on every
    # generation incl. v5e); counts are exact small ints (0..F).
    counts = jnp.zeros((tn, e_pad), jnp.float32)
    for f in range(nfeat):                  # F is small & static -> unrolled
        counts = counts + (idx[:, f:f + 1] == eids).astype(jnp.float32)
    counts = counts.astype(emb_ref.dtype)   # single cast, right before the dot

    # Gather + feature-sum as one MXU matmul; f32 accumulation.
    summed = jnp.dot(counts, emb_ref[...],
                     preferred_element_type=jnp.float32)            # (TN, D)

    # Fused LayerNorm over D via sum / sum-of-squares (f32, O(F)-magnitude
    # values, numerically safe).
    d = summed.shape[-1]
    inv_d = 1.0 / d
    s1 = jnp.sum(summed, axis=-1, keepdims=True)
    s2 = jnp.sum(summed * summed, axis=-1, keepdims=True)
    mean = s1 * inv_d
    var = s2 * inv_d - mean * mean
    normed = (summed - mean) * jax.lax.rsqrt(var + eps)
    out_ref[...] = (normed * gamma_ref[...] + beta_ref[...]).astype(out_ref.dtype)


def category_feature_embedding(x, starts, emb_table, gamma, beta,
                               *, eps=1e-5, token_tile=512,
                               matmul_dtype=jnp.bfloat16):
    """x: (B, S, F) integer ids; returns (B, S, D) float32."""
    B, S, F = x.shape
    E_pad, D = emb_table.shape
    N = B * S

    # bf16 counts are exact only while the max count (F) is far below 256.
    assert F < 256, "feature count too large for exact bf16 counts"

    # Fold per-feature start offsets into the indices host-side (tiny XLA op).
    idx = x.reshape(N, F).astype(jnp.int32) + starts.reshape(1, F).astype(jnp.int32)

    # Cast the table once in the wrapper: halves table DMA + VMEM residency
    # and removes the per-grid-step in-kernel convert.
    emb = emb_table.astype(matmul_dtype)

    # Token tile: large (amortizes ~0.35us/step, fills the MXU M dim), but
    # capped so there are >= 2 grid steps for moderate N (keeps both v7x
    # TensorCores busy via the "parallel" axis).  No host-side padding:
    # Pallas masks the partial edge block.
    half = _round_up(pl.cdiv(N, 2), 8)
    tn = max(8, min(_round_up(token_tile, 8), half))
    grid = (pl.cdiv(N, tn),)

    table_bytes = E_pad * D * jnp.dtype(matmul_dtype).itemsize
    cost = pl.CostEstimate(
        flops=2 * N * E_pad * D + N * E_pad * F + 6 * N * D,
        transcendentals=N,                               # rsqrt per token
        bytes_accessed=N * F * 4 + N * D * 4 + table_bytes + 2 * D * 4,
    )

    kernel = functools.partial(_cat_embed_kernel, eps=eps)
    out = pl.pallas_call(
        kernel,
        out_shape=jax.ShapeDtypeStruct((N, D), jnp.float32),
        grid_spec=pltpu.PrefetchScalarGridSpec(
            num_scalar_prefetch=0,
            grid=grid,
            in_specs=[
                pl.BlockSpec((tn, F), lambda i: (i, 0)),         # per-tile ids
                pl.BlockSpec((E_pad, D), lambda i: (0, 0)),      # resident table
                pl.BlockSpec((1, D), lambda i: (0, 0)),          # gamma
                pl.BlockSpec((1, D), lambda i: (0, 0)),          # beta
            ],
            out_specs=pl.BlockSpec((tn, D), lambda i: (i, 0)),
        ),
        compiler_params=pltpu.CompilerParams(
            dimension_semantics=("parallel",)),
        cost_estimate=cost,
    )(idx, emb, gamma, beta)
    return out.reshape(B, S, D)


def _reference(x, starts, emb_table, gamma, beta, eps=1e-5):
    off = x.astype(jnp.int32) + starts.reshape(1, 1, -1)     # (B,S,F)
    e = emb_table[off]                                       # (B,S,F,D)
    y = e.sum(axis=-2)                                       # (B,S,D)
    mean = y.mean(-1, keepdims=True)
    var = ((y - mean) ** 2).mean(-1, keepdims=True)
    return (y - mean) * jax.lax.rsqrt(var + eps) * gamma + beta


if __name__ == "__main__":
    key = jax.random.PRNGKey(0)

    # Module config: 4 categorical features with these cardinalities.
    num_uniq_values = [5, 7, 3, 11]
    embed_dim = 128
    B, S = 2, 8
    F = len(num_uniq_values)

    num_uniq = jnp.array(num_uniq_values, dtype=jnp.int32)
    csum = jnp.cumsum(num_uniq)
    num_emb = int(csum[-1])                                  # 26
    starts = jnp.concatenate([jnp.zeros((1,), jnp.int32),
                              csum[:-1]]).reshape(1, F).astype(jnp.int32)

    # Deterministic parameter init (nn.Embedding ~ N(0,1); LayerNorm gamma=1, beta=0).
    k_emb, k_x, k_x2 = jax.random.split(key, 3)
    E_pad = 128                                              # pad table rows for lanes
    emb_table = jnp.zeros((E_pad, embed_dim), jnp.float32)
    emb_table = emb_table.at[:num_emb].set(
        jax.random.normal(k_emb, (num_emb, embed_dim), jnp.float32))
    gamma = jnp.ones((1, embed_dim), jnp.float32)
    beta = jnp.zeros((1, embed_dim), jnp.float32)

    # Deterministic input category ids, each within its feature's cardinality.
    u = jax.random.uniform(k_x, (B, S, F))
    x = jnp.floor(u * num_uniq.astype(jnp.float32)).astype(jnp.int32)

    # Input validation (the PyTorch forward raises on out-of-range ids).
    # TODO(synk): data-dependent RuntimeError has no in-kernel equivalent; checked host-side.
    assert bool(jnp.all(x >= 0)) and bool(jnp.all(x < num_uniq.reshape(1, 1, F)))

    out = category_feature_embedding(x, starts, emb_table, gamma, beta)
    out = jax.block_until_ready(out)
    assert out.shape == (B, S, embed_dim)

    # Kernel numerics: exact up to the bf16 cast of the table (counts are exact),
    # so compare tightly against a bf16-table reference and loosely against f32.
    ref_bf16 = _reference(x, starts,
                          emb_table.astype(jnp.bfloat16).astype(jnp.float32),
                          gamma, beta)
    ref_f32 = _reference(x, starts, emb_table, gamma, beta)
    assert jnp.allclose(out, ref_bf16, atol=1e-4, rtol=1e-4)
    assert jnp.allclose(out, ref_f32, atol=3e-2, rtol=3e-2)

    # Also exercise the multi-step grid WITH a partial edge block (N=21, tn=16).
    B2, S2 = 3, 7
    u2 = jax.random.uniform(k_x2, (B2, S2, F))
    x2 = jnp.floor(u2 * num_uniq.astype(jnp.float32)).astype(jnp.int32)
    out2 = category_feature_embedding(x2, starts, emb_table, gamma, beta)
    out2 = jax.block_until_ready(out2)
    ref2_bf16 = _reference(x2, starts,
                           emb_table.astype(jnp.bfloat16).astype(jnp.float32),
                           gamma, beta)
    assert out2.shape == (B2, S2, embed_dim)
    assert jnp.allclose(out2, ref2_bf16, atol=1e-4, rtol=1e-4)

    print("KERNEL_OK")
</pallas_src>

<mosaic_0001>
module attributes {stable_mosaic.version = 11 : i64} {
  func.func @_cat_embed_kernel(%arg0: i32, %arg1: memref<8x4xi32, #tpu.memory_space<vmem>>, %arg2: memref<128x128xbf16, #tpu.memory_space<vmem>>, %arg3: memref<1x128xf32, #tpu.memory_space<vmem>>, %arg4: memref<1x128xf32, #tpu.memory_space<vmem>>, %arg5: memref<8x128xf32, #tpu.memory_space<vmem>>) attributes {dimension_semantics = [#tpu.dimension_semantics<parallel>], iteration_bounds = array<i64: 2>, scalar_prefetch = 0 : i64, scratch_operands = 0 : i64, tpu.core_type = #tpu.core_type<tc>, window_params = [{transform_indices = @transform_0, window_bounds = array<i64: 8, 4>}, {pipeline_mode = #tpu.pipeline_mode<synchronous>, transform_indices = @transform_1, window_bounds = array<i64: 128, 128>}, {pipeline_mode = #tpu.pipeline_mode<synchronous>, transform_indices = @transform_2, window_bounds = array<i64: 1, 128>}, {pipeline_mode = #tpu.pipeline_mode<synchronous>, transform_indices = @transform_3, window_bounds = array<i64: 1, 128>}, {transform_indices = @transform_4, window_bounds = array<i64: 8, 128>}]} {
    %c0 = arith.constant 0 : index
    %c0_0 = arith.constant 0 : index
    %0 = vector.load %arg1[%c0, %c0_0] : memref<8x4xi32, #tpu.memory_space<vmem>>, vector<8x4xi32>
    %1 = tpu.iota {dimensions = array<i32: 1>} : vector<1x128xi32>
    %cst = arith.constant 0.000000e+00 : f32
    %2 = vector.broadcast %cst : f32 to vector<8x128xf32>
    %3 = vector.extract_strided_slice %0 {offsets = [0, 0], sizes = [8, 1], strides = [1, 1]} : vector<8x4xi32> to vector<8x1xi32>
    %4 = vector.broadcast %3 : vector<8x1xi32> to vector<8x128xi32>
    %5 = vector.broadcast %1 : vector<1x128xi32> to vector<8x128xi32>
    %6 = arith.cmpi eq, %4, %5 : vector<8x128xi32>
    %7 = arith.extui %6 : vector<8x128xi1> to vector<8x128xi32>
    %8 = arith.sitofp %7 : vector<8x128xi32> to vector<8x128xf32>
    %9 = arith.addf %2, %8 : vector<8x128xf32>
    %10 = vector.extract_strided_slice %0 {offsets = [0, 1], sizes = [8, 1], strides = [1, 1]} : vector<8x4xi32> to vector<8x1xi32>
    %11 = vector.broadcast %10 : vector<8x1xi32> to vector<8x128xi32>
    %12 = vector.broadcast %1 : vector<1x128xi32> to vector<8x128xi32>
    %13 = arith.cmpi eq, %11, %12 : vector<8x128xi32>
    %14 = arith.extui %13 : vector<8x128xi1> to vector<8x128xi32>
    %15 = arith.sitofp %14 : vector<8x128xi32> to vector<8x128xf32>
    %16 = arith.addf %9, %15 : vector<8x128xf32>
    %17 = vector.extract_strided_slice %0 {offsets = [0, 2], sizes = [8, 1], strides = [1, 1]} : vector<8x4xi32> to vector<8x1xi32>
    %18 = vector.broadcast %17 : vector<8x1xi32> to vector<8x128xi32>
    %19 = vector.broadcast %1 : vector<1x128xi32> to vector<8x128xi32>
    %20 = arith.cmpi eq, %18, %19 : vector<8x128xi32>
    %21 = arith.extui %20 : vector<8x128xi1> to vector<8x128xi32>
    %22 = arith.sitofp %21 : vector<8x128xi32> to vector<8x128xf32>
    %23 = arith.addf %16, %22 : vector<8x128xf32>
    %24 = vector.extract_strided_slice %0 {offsets = [0, 3], sizes = [8, 1], strides = [1, 1]} : vector<8x4xi32> to vector<8x1xi32>
    %25 = vector.broadcast %24 : vector<8x1xi32> to vector<8x128xi32>
    %26 = vector.broadcast %1 : vector<1x128xi32> to vector<8x128xi32>
    %27 = arith.cmpi eq, %25, %26 : vector<8x128xi32>
    %28 = arith.extui %27 : vector<8x128xi1> to vector<8x128xi32>
    %29 = arith.sitofp %28 : vector<8x128xi32> to vector<8x128xf32>
    %30 = arith.addf %23, %29 : vector<8x128xf32>
    %31 = arith.truncf %30 : vector<8x128xf32> to vector<8x128xbf16>
    %c0_1 = arith.constant 0 : index
    %c0_2 = arith.constant 0 : index
    %32 = vector.load %arg2[%c0_1, %c0_2] : memref<128x128xbf16, #tpu.memory_space<vmem>>, vector<128x128xbf16>
    %cst_3 = arith.constant dense<0.000000e+00> : vector<8x128xf32>
    %33 = tpu.matmul %31, %32, %cst_3 {dimension_numbers = #tpu.dot_dimension_numbers<[1], [0], [0], [1], [0, 0, 1, 1], [], []>} : vector<8x128xbf16>, vector<128x128xbf16>, vector<8x128xf32> -> vector<8x128xf32>
    %cst_4 = arith.constant dense<0.000000e+00> : vector<8xf32>
    %34 = vector.multi_reduction <add>, %33, %cst_4 [1] : vector<8x128xf32> to vector<8xf32>
    %35 = vector.shape_cast %34 : vector<8xf32> to vector<8x1xf32>
    %36 = arith.mulf %33, %33 : vector<8x128xf32>
    %cst_5 = arith.constant dense<0.000000e+00> : vector<8xf32>
    %37 = vector.multi_reduction <add>, %36, %cst_5 [1] : vector<8x128xf32> to vector<8xf32>
    %38 = vector.shape_cast %37 : vector<8xf32> to vector<8x1xf32>
    %cst_6 = arith.constant 7.812500e-03 : f32
    %39 = vector.broadcast %cst_6 : f32 to vector<8x1xf32>
    %40 = arith.mulf %35, %39 : vector<8x1xf32>
    %cst_7 = arith.constant 7.812500e-03 : f32
    %41 = vector.broadcast %cst_7 : f32 to vector<8x1xf32>
    %42 = arith.mulf %38, %41 : vector<8x1xf32>
    %43 = arith.mulf %40, %40 : vector<8x1xf32>
    %44 = arith.subf %42, %43 : vector<8x1xf32>
    %45 = vector.broadcast %40 : vector<8x1xf32> to vector<8x128xf32>
    %46 = arith.subf %33, %45 : vector<8x128xf32>
    %cst_8 = arith.constant 9.99999974E-6 : f32
    %47 = vector.broadcast %cst_8 : f32 to vector<8x1xf32>
    %48 = arith.addf %44, %47 : vector<8x1xf32>
    %49 = math.rsqrt %48 : vector<8x1xf32>
    %50 = vector.broadcast %49 : vector<8x1xf32> to vector<8x128xf32>
    %51 = arith.mulf %46, %50 : vector<8x128xf32>
    %c0_9 = arith.constant 0 : index
    %c0_10 = arith.constant 0 : index
    %52 = vector.load %arg3[%c0_9, %c0_10] : memref<1x128xf32, #tpu.memory_space<vmem>>, vector<1x128xf32>
    %53 = vector.broadcast %52 : vector<1x128xf32> to vector<8x128xf32>
    %54 = arith.mulf %51, %53 : vector<8x128xf32>
    %c0_11 = arith.constant 0 : index
    %c0_12 = arith.constant 0 : index
    %55 = vector.load %arg4[%c0_11, %c0_12] : memref<1x128xf32, #tpu.memory_space<vmem>>, vector<1x128xf32>
    %56 = vector.broadcast %55 : vector<1x128xf32> to vector<8x128xf32>
    %57 = arith.addf %54, %56 : vector<8x128xf32>
    %c0_13 = arith.constant 0 : index
    %c0_14 = arith.constant 0 : index
    %58 = vector.load %arg5[%c0_13, %c0_14] : memref<8x128xf32, #tpu.memory_space<vmem>>, vector<8x128xf32>
    tpu.vector_store %arg5[%c0_13, %c0_14], %57 {strides = array<i32>} : memref<8x128xf32, #tpu.memory_space<vmem>>, vector<8x128xf32>,
    return
  }
  func.func @transform_0(%arg0: i32) -> (i32, i32) {
    %c0_i32 = arith.constant 0 : i32
    %c0_i32_0 = arith.constant 0 : i32
    return %arg0, %c0_i32 : i32, i32
  }
  func.func @transform_1(%arg0: i32) -> (i32, i32) {
    %c0_i32 = arith.constant 0 : i32
    %c0_i32_0 = arith.constant 0 : i32
    %c0_i32_1 = arith.constant 0 : i32
    return %c0_i32, %c0_i32_0 : i32, i32
  }
  func.func @transform_2(%arg0: i32) -> (i32, i32) {
    %c0_i32 = arith.constant 0 : i32
    %c0_i32_0 = arith.constant 0 : i32
    %c0_i32_1 = arith.constant 0 : i32
    return %c0_i32, %c0_i32_0 : i32, i32
  }
  func.func @transform_3(%arg0: i32) -> (i32, i32) {
    %c0_i32 = arith.constant 0 : i32
    %c0_i32_0 = arith.constant 0 : i32
    %c0_i32_1 = arith.constant 0 : i32
    return %c0_i32, %c0_i32_0 : i32, i32
  }
  func.func @transform_4(%arg0: i32) -> (i32, i32) {
    %c0_i32 = arith.constant 0 : i32
    %c0_i32_0 = arith.constant 0 : i32
    return %arg0, %c0_i32 : i32, i32
  }
}

</mosaic_0001>

<llo_original>
// kernel: tpu_custom_call.1
$region0: #{tpu_custom_call.1}
  #allocation0 [shape = 'u32[]', space=smem, size = 0x4, offset = 0x4, fixed_abs, tag = 'smem constant byte address 0x4 - core index']
  #allocation1 [shape = 'u32[144,128]{1,0:T(1,128)}', space=vmem, size = 0x12000, scoped, tag = 'internal scratch']
  %s0 = inlined_call_operand.vmem [shape: s32[16,4], index: 0, kind: input, shape index: {}]
  %s1 = inlined_call_operand.hbm [shape: bf16[128,128], index: 1, kind: input, shape index: {}]
  %s2 = inlined_call_operand.vmem [shape: f32[1,128], index: 2, kind: input, shape index: {}]
  %s3 = inlined_call_operand.vmem [shape: f32[1,128], index: 3, kind: input, shape index: {}]
  %s4 = inlined_call_operand.hbm [shape: f32[16,128], index: 4, kind: output, shape index: {}]
  %s5 = sld [smem:[#allocation0]]
  $region53: #{tpu_custom_call.1} parent=0
    _
  %s7 = ssub.s32 1, %s5
  %s8 = scalar_select 0, %s7, %s5
  $region1: #{tpu_custom_call.1} parent=0
    #allocation2 [shape = 'u8[32768]{0}', space=vmem, size = 0x8000, scoped, tag = 'input window, operand 1, single buffered']
    #allocation3 [shape = 's32[2]{0}', space=sflag, size = 0x8, scoped, tag = 'scoped memory for tpu_custom_call.1']
    #allocation4 [shape = 's32[2]{0}', space=sflag, size = 0x8, scoped, tag = 'scoped memory for tpu_custom_call.1']
    #allocation5 [shape = 'u8[8192]{0}', space=vmem, size = 0x2000, scoped, tag = 'output window, operand 0']
    %9 = vsyncpa [#allocation3], 0
    %10 = vsyncpa [#allocation4], 0
    %s11 = scalar_lea.sflag [#allocation4], 1
    %12 = vsyncpa %s11, 0
    loop: start=0, step=1, limit=4
    $region2: #{tpu_custom_call.1} parent=1 // loop_pre_header
      _
    $region3: #{tpu_custom_call.1} parent=1 // loop_header
      %s14 = sphi 0, %s18
      %p15 = scmp.ge.s32.totalorder %s14, 4
      %s24 = sphi 0, %s26
      %s27 = sphi 0, %s24
      %s28 = sphi 0, %s27
      %s44 = sphi 0, %s28
      %s48 = sphi 0, %s48
      %s50 = sphi 0, %s48
      %s51 = sphi 0, %s50
      %s65 = sphi 0, %s51
      %s69 = sphi 0, %s69
      %s71 = sphi 0, %s69
      %s72 = sphi 0, %s71
      %s86 = sphi 0, %s72
      %s90 = sphi 0, %s90
      %s92 = sphi 0, %s90
      %s93 = sphi 0, %s92
      %s107 = sphi 0, %s93
      %s113 = sphi 0, %s115
      %s116 = sphi 0, %s113
      %s117 = sphi 0, %s116
      %s133 = sphi 0, %s117
    $region4: #{tpu_custom_call.1} parent=1 // loop_header_branch
      %17 = sbr.rel (%p15) target = $region8
    $region5: #{tpu_custom_call.1} parent=1 // loop_body
      %s19 = ssub.s32 %s14, 1
      %s20 = ssub.s32 %s14, 2
      %s21 = sadd.s32 %s14, 1
      %s22 = ssub.s32 %s14, %s21
      %p23 = scmp.eq.s32.totalorder %s22, 0
      %s25 = sadd.s32 %s24, 1
      %s26 = scalar_select %p23, %s24, %s25
      %p29 = pneg %p23
      %p30 = scmp.eq.s32.totalorder %s14, 1
      %p31 = por %p29, %p30
      %p32 = scmp.ne.s32.totalorder %s24, %s27
      %p33 = scmp.eq.s32.totalorder %s14, 0
      %p34 = por %p32, %p33
      %p35 = scmp.ne.s32.totalorder %s24, %s27
      %p36 = scmp.eq.s32.totalorder %s19, 1
      %p37 = por %p35, %p36
      %p38 = scmp.ne.s32.totalorder %s27, %s28
      %p39 = scmp.eq.s32.totalorder %s19, 0
      %p40 = por %p38, %p39
      %p41 = scmp.ne.s32.totalorder %s27, %s28
      %p42 = scmp.eq.s32.totalorder %s20, 1
      %p43 = por %p41, %p42
      %p45 = scmp.ne.s32.totalorder %s28, %s44
      %p46 = scmp.eq.s32.totalorder %s20, 0
      %p47 = por %p45, %p46
      %s49 = sadd.s32 %s48, 1
      %p52 = scmp.eq.s32.totalorder %s14, 1
      %p53 = scmp.ne.s32.totalorder %s48, %s50
      %p54 = scmp.eq.s32.totalorder %s14, 0
      %p55 = por %p53, %p54
      %p56 = scmp.ne.s32.totalorder %s48, %s50
      %p57 = scmp.eq.s32.totalorder %s19, 1
      %p58 = por %p56, %p57
      %p59 = scmp.ne.s32.totalorder %s50, %s51
      %p60 = scmp.eq.s32.totalorder %s19, 0
      %p61 = por %p59, %p60
      %p62 = scmp.ne.s32.totalorder %s50, %s51
      %p63 = scmp.eq.s32.totalorder %s20, 1
      %p64 = por %p62, %p63
      %p66 = scmp.ne.s32.totalorder %s51, %s65
      %p67 = scmp.eq.s32.totalorder %s20, 0
      %p68 = por %p66, %p67
      %s70 = sadd.s32 %s69, 1
      %p73 = scmp.eq.s32.totalorder %s14, 1
      %p74 = scmp.ne.s32.totalorder %s69, %s71
      %p75 = scmp.eq.s32.totalorder %s14, 0
      %p76 = por %p74, %p75
      %p77 = scmp.ne.s32.totalorder %s69, %s71
      %p78 = scmp.eq.s32.totalorder %s19, 1
      %p79 = por %p77, %p78
      %p80 = scmp.ne.s32.totalorder %s71, %s72
      %p81 = scmp.eq.s32.totalorder %s19, 0
      %p82 = por %p80, %p81
      %p83 = scmp.ne.s32.totalorder %s71, %s72
      %p84 = scmp.eq.s32.totalorder %s20, 1
      %p85 = por %p83, %p84
      %p87 = scmp.ne.s32.totalorder %s72, %s86
      %p88 = scmp.eq.s32.totalorder %s20, 0
      %p89 = por %p87, %p88
      %s91 = sadd.s32 %s90, 1
      %p94 = scmp.eq.s32.totalorder %s14, 1
      %p95 = scmp.ne.s32.totalorder %s90, %s92
      %p96 = scmp.eq.s32.totalorder %s14, 0
      %p97 = por %p95, %p96
      %p98 = scmp.ne.s32.totalorder %s90, %s92
      %p99 = scmp.eq.s32.totalorder %s19, 1
      %p100 = por %p98, %p99
      %p101 = scmp.ne.s32.totalorder %s92, %s93
      %p102 = scmp.eq.s32.totalorder %s19, 0
      %p103 = por %p101, %p102
      %p104 = scmp.ne.s32.totalorder %s92, %s93
      %p105 = scmp.eq.s32.totalorder %s20, 1
      %p106 = por %p104, %p105
      %p108 = scmp.ne.s32.totalorder %s93, %s107
      %p109 = scmp.eq.s32.totalorder %s20, 0
      %p110 = por %p108, %p109
      %s111 = ssub.s32 %s14, %s21
      %p112 = scmp.eq.s32.totalorder %s111, 0
      %s114 = sadd.s32 %s113, 1
      %s115 = scalar_select %p112, %s113, %s114
      %p118 = pneg %p112
      %p119 = scmp.eq.s32.totalorder %s14, 1
      %p120 = por %p118, %p119
      %p121 = scmp.ne.s32.totalorder %s113, %s116
      %p122 = scmp.eq.s32.totalorder %s14, 0
      %p123 = por %p121, %p122
      %p124 = scmp.ne.s32.totalorder %s113, %s116
      %p125 = scmp.eq.s32.totalorder %s19, 1
      %p126 = por %p124, %p125
      %p127 = scmp.ne.s32.totalorder %s116, %s117
      %p128 = scmp.eq.s32.totalorder %s19, 0
      %p129 = por %p127, %p128
      %p130 = scmp.ne.s32.totalorder %s116, %s117
      %p131 = scmp.eq.s32.totalorder %s20, 1
      %p132 = por %p130, %p131
      %p134 = scmp.ne.s32.totalorder %s117, %s133
      %p135 = scmp.eq.s32.totalorder %s20, 0
      %p136 = por %p134, %p135
      %p137 = scmp.le.s32.totalorder 1, %s14
      %p138 = scmp.lt.s32.totalorder %s14, 3
      %p139 = pnand %p137, %p138
      %p140 = pneg %p139
      // Predicated region
      $region9: #{tpu_custom_call.1} parent=5 // pred_check
        _
      $region10: #{tpu_custom_call.1} parent=5 // pred_check_branch
        %142 = sbr.rel (%p139) target = $region12
      $region11: #{tpu_custom_call.1} parent=5 // pred_region
        %s143 = ssub.s32 %s14, 1
        // Predicated region
        $region13: #{tpu_custom_call.1} parent=11 // pred_check
          %p144 = pneg %p61
        $region14: #{tpu_custom_call.1} parent=11 // pred_check_branch
          %146 = sbr.rel (%p144) target = $region16
        $region15: #{tpu_custom_call.1} parent=11 // pred_region
          %s148 = ssub.s32 1024, 1024
          %149 = vsyncadd [#allocation3], %s148
          %s150 = sshll.u32 [#allocation2], 4
          %s151 = int_to_ptr.vmem [resolvable:$true] %s150
          %156 = dma.hbm_to_vmem [thread:$0]  %s1, 1024, %s151, [#allocation3], 64, 64, 4
        $region16: #{tpu_custom_call.1} parent=11 // pred_fallthru
          _
        // Predicated region
        $region17: #{tpu_custom_call.1} parent=11 // pred_check
          %p157 = pneg %p82
        $region18: #{tpu_custom_call.1} parent=11 // pred_check_branch
          %159 = sbr.rel (%p157) target = $region20
        $region19: #{tpu_custom_call.1} parent=11 // pred_region
          _
        $region20: #{tpu_custom_call.1} parent=11 // pred_fallthru
          _
        // Predicated region
        $region21: #{tpu_custom_call.1} parent=11 // pred_check
          %p160 = pneg %p103
        $region22: #{tpu_custom_call.1} parent=11 // pred_check_branch
          %162 = sbr.rel (%p160) target = $region24
        $region23: #{tpu_custom_call.1} parent=11 // pred_region
          _
        $region24: #{tpu_custom_call.1} parent=11 // pred_fallthru
          _
      $region12: #{tpu_custom_call.1} parent=5 // pred_fallthru
        _
      %p163 = scmp.lt.s32.totalorder %s14, 2
      // Predicated region
      $region25: #{tpu_custom_call.1} parent=5 // pred_check
        %p164 = pneg %p163
      $region26: #{tpu_custom_call.1} parent=5 // pred_check_branch
        %166 = sbr.rel (%p164) target = $region28
      $region27: #{tpu_custom_call.1} parent=5 // pred_region
        // Predicated region
        $region29: #{tpu_custom_call.1} parent=27 // pred_check
          %p167 = pneg %p34
        $region30: #{tpu_custom_call.1} parent=27 // pred_check_branch
          %169 = sbr.rel (%p167) target = $region32
        $region31: #{tpu_custom_call.1} parent=27 // pred_region
          %p170 = scmp.lt.s32.totalorder %s14, 1
          %s171 = scalar_select %p170, %s14, 1
          %s172 = smul.addr %s171, 8
          %s173 = scalar_lea.vmem %s0, %s172
        $region32: #{tpu_custom_call.1} parent=27 // pred_fallthru
          _
      $region28: #{tpu_custom_call.1} parent=5 // pred_fallthru
        _
      %p174 = scmp.le.s32.totalorder 1, %s14
      %p175 = scmp.lt.s32.totalorder %s14, 3
      %p176 = pnand %p174, %p175
      %p177 = pneg %p176
      // Predicated region
      $region33: #{tpu_custom_call.1} parent=5 // pred_check
        _
      $region34: #{tpu_custom_call.1} parent=5 // pred_check_branch
        %179 = sbr.rel (%p176) target = $region36
      $region35: #{tpu_custom_call.1} parent=5 // pred_region
        %s180 = ssub.s32 %s14, 1
        // Predicated region
        $region37: #{tpu_custom_call.1} parent=35 // pred_check
          %p181 = pneg %p61
        $region38: #{tpu_custom_call.1} parent=35 // pred_check_branch
          %183 = sbr.rel (%p181) target = $region40
        $region39: #{tpu_custom_call.1} parent=35 // pred_region
          %184 = dma.done [#allocation3], 1024
        $region40: #{tpu_custom_call.1} parent=35 // pred_fallthru
          _
        %p185 = scmp.lt.s32.totalorder %s19, 1
        %s186 = scalar_select %p185, %s19, 1
        %s187 = smul.addr %s186, 8
        %s188 = scalar_lea.vmem %s0, %s187
        %p189 = pneg %p40
        %p190 = pneg %p37
        %p191 = pneg %p61
        %p192 = pneg %p58
        %p193 = pneg %p82
        %p194 = pneg %p79
        %p195 = pneg %p103
        %p196 = pneg %p100
        %p197 = pneg %p129
        %p198 = pneg %p126
        %s199 = sand.u32 %s116, 1
        %s200 = scalar_lea.sflag [#allocation4], %s199
        %s201 = sand.u32 %s116, 1
        %s202 = smul.addr %s201, 8
        %s203 = scalar_lea.vmem [#allocation5], %s202
        %p204 = scmp.lt.s32.totalorder %s19, 1
        %s205 = scalar_select %p204, %s19, 1
        %s206 = smul.addr %s205, 8
        %s207 = scalar_lea.vmem %s0, %s206
        %v209 = vld [vmem:[%s207] sm:$0xff]
        %v210 = vlaneseq
        %v211 = vand.u32 %v210, 127
        %212 = vset.pattern.permute.xlu0 0
        %213 = vperm.xlu0 %212, %v209
        %v214 = vpop.permute.xlu0 %213
        %vm215 = vcmp.eq.s32.totalorder %v214, %v211
        %v216 = vsel %vm215, 1, 0
        %v217 = vcvt.s32.f32 %v216
        %v218 = vadd.f32 %v217, 0.0
        %219 = vset.pattern.permute.xlu0 1
        %220 = vperm.xlu0 %219, %v209
        %v221 = vpop.permute.xlu0 %220
        %vm222 = vcmp.eq.s32.totalorder %v221, %v211
        %v223 = vsel %vm222, 1, 0
        %v224 = vcvt.s32.f32 %v223
        %v225 = vadd.f32 %v218, %v224
        %226 = vset.pattern.permute.xlu0 2
        %227 = vperm.xlu0 %226, %v209
        %v228 = vpop.permute.xlu0 %227
        %vm229 = vcmp.eq.s32.totalorder %v228, %v211
        %v230 = vsel %vm229, 1, 0
        %v231 = vcvt.s32.f32 %v230
        %v232 = vadd.f32 %v225, %v231
        %233 = vset.pattern.permute.xlu0 3
        %234 = vperm.xlu0 %233, %v209
        %v235 = vpop.permute.xlu0 %234
        %vm236 = vcmp.eq.s32.totalorder %v235, %v211
        %v237 = vsel %vm236, 1, 0
        %v238 = vcvt.s32.f32 %v237
        %v239 = vadd.f32 %v232, %v238
        %v240 = vpack.c.bf16 %v239, %v239
        %v241 = vld [vmem:[#allocation2] sm:$0xf]
        %v242 = vld [vmem:[#allocation2 + $0x4] sm:$0xf]
        %v243 = vld [vmem:[#allocation2 + $0x8] sm:$0xf]
        %v244 = vld [vmem:[#allocation2 + $0xc] sm:$0xf]
        %v245 = vld [vmem:[#allocation2 + $0x10] sm:$0xf]
        %v246 = vld [vmem:[#allocation2 + $0x14] sm:$0xf]
        %v247 = vld [vmem:[#allocation2 + $0x18] sm:$0xf]
        %v248 = vld [vmem:[#allocation2 + $0x1c] sm:$0xf]
        %v249 = vld [vmem:[#allocation2 + $0x20] sm:$0xf]
        %v250 = vld [vmem:[#allocation2 + $0x24] sm:$0xf]
        %v251 = vld [vmem:[#allocation2 + $0x28] sm:$0xf]
        %v252 = vld [vmem:[#allocation2 + $0x2c] sm:$0xf]
        %v253 = vld [vmem:[#allocation2 + $0x30] sm:$0xf]
        %v254 = vld [vmem:[#allocation2 + $0x34] sm:$0xf]
        %v255 = vld [vmem:[#allocation2 + $0x38] sm:$0xf]
        %v256 = vld [vmem:[#allocation2 + $0x3c] sm:$0xf]
        %v273 = vunpack.c.l.b16 %v241
        %v274 = vunpack.c.l.b16 %v242
        %v275 = vunpack.c.l.b16 %v243
        %v276 = vunpack.c.l.b16 %v244
        %v277 = vunpack.c.l.b16 %v245
        %v278 = vunpack.c.l.b16 %v246
        %v279 = vunpack.c.l.b16 %v247
        %v280 = vunpack.c.l.b16 %v248
        %v281 = vunpack.c.l.b16 %v249
        %v282 = vunpack.c.l.b16 %v250
        %v283 = vunpack.c.l.b16 %v251
        %v284 = vunpack.c.l.b16 %v252
        %v285 = vunpack.c.l.b16 %v253
        %v286 = vunpack.c.l.b16 %v254
        %v287 = vunpack.c.l.b16 %v255
        %v288 = vunpack.c.l.b16 %v256
        %v289 = vpack.c.b16 %v274, %v273
        %v290 = vpack.c.b16 %v276, %v275
        %v291 = vpack.c.b16 %v278, %v277
        %v292 = vpack.c.b16 %v280, %v279
        %v293 = vpack.c.b16 %v282, %v281
        %v294 = vpack.c.b16 %v284, %v283
        %v295 = vpack.c.b16 %v286, %v285
        %v296 = vpack.c.b16 %v288, %v287
        %305 = vmatprep.subr.bf16.mxu0 0
        %306 = vmatpush1.bf16.msra.mxu0 %v289
        %307 = vmatprep.subr.bf16.mxu0 0
        %308 = vmatpush1.bf16.msra.mxu0 %v290
        %309 = vmatprep.subr.bf16.mxu0 0
        %310 = vmatpush1.bf16.msra.mxu0 %v291
        %311 = vmatprep.subr.bf16.mxu0 0
        %312 = vmatpush1.bf16.msra.mxu0 %v292
        %313 = vmatprep.subr.bf16.mxu0 0
        %314 = vmatpush1.bf16.msra.mxu0 %v293
        %315 = vmatprep.subr.bf16.mxu0 0
        %316 = vmatpush1.bf16.msra.mxu0 %v294
        %317 = vmatprep.subr.bf16.mxu0 0
        %318 = vmatpush1.bf16.msra.mxu0 %v295
        %319 = vmatprep.subr.bf16.mxu0 0
        %320 = vmatpush1.bf16.msra.mxu0 %v296
        %321 = vmatprep.subr.bf16.mxu0 0
        %322 = vmatpush1.bf16.msra.mxu0 0
        %323 = vmatprep.subr.bf16.mxu0 0
        %324 = vmatpush1.bf16.msra.mxu0 0
        %325 = vmatprep.subr.bf16.mxu0 0
        %326 = vmatpush1.bf16.msra.mxu0 0
        %327 = vmatprep.subr.bf16.mxu0 0
        %328 = vmatpush1.bf16.msra.mxu0 0
        %329 = vmatprep.subr.bf16.mxu0 0
        %330 = vmatpush1.bf16.msra.mxu0 0
        %331 = vmatprep.subr.bf16.mxu0 0
        %332 = vmatpush1.bf16.msra.mxu0 0
        %333 = vmatprep.subr.bf16.mxu0 0
        %334 = vmatpush1.bf16.msra.mxu0 0
        %335 = vmatprep.subr.bf16.mxu0 0
        %336 = vmatpush1.bf16.msra.mxu0 0
        %337 = vmatprep.mubr.bf16.mxu0 0
        %338 = vmatmul.mubr.bf16.gmra.mrb[0].mxu0 %v240
        %v339 = vpop.f32.mrb[0].mxu0
        %v340 = vadd.f32 0.0, %v339
        %v341 = vpop.f32.mrb[0].mxu0
        %v342 = vpop.f32.mrb[0].mxu0
        %v343 = vpop.f32.mrb[0].mxu0
        %344 = vdwg.mxu0
        %345 = vadd.xlane.f32.xlu0 %v340
        %v346 = vpop.xlane.xlu0 %345
        %v347 = vmul.f32 %v340, %v340
        %348 = vadd.xlane.f32.xlu0 %v347
        %v349 = vpop.xlane.xlu0 %348
        %v350 = vmul.f32 %v346, 0.0078125
        %v351 = vmul.f32 %v349, 0.0078125
        %v352 = vmul.f32 %v350, %v350
        %v353 = vsub.f32 %v351, %v352
        %v354 = vsub.f32 %v340, %v350
        %v355 = vadd.f32 %v353, 1e-05
        %v356 = vrsqrt.pop %v355
        %v357 = vmul.f32 %v354, %v356
        %v358 = vld [vmem:[%s2] sm:$0x1]
        %v360 = vlaneseq
        %v361 = vshrl.u32 %v360, 7
        %v362 = vsub.s32 0, %v361
        %v363 = vrot.slane %v358, %v362
        %v365 = vmul.f32 %v357, %v363
        %v366 = vld [vmem:[%s3] sm:$0x1]
        %v368 = vlaneseq
        %v369 = vshrl.u32 %v368, 7
        %v370 = vsub.s32 0, %v369
        %v371 = vrot.slane %v366, %v370
        %v373 = vadd.f32 %v365, %v371
        %374 = vst [vmem:[%s203] sm:$0xff] %v373
        %s375 = sand.u32 %s116, 1
        %s376 = scalar_lea.sflag [#allocation4], %s375
        %s377 = sand.u32 %s116, 1
        %s378 = smul.addr %s377, 8
        %s379 = scalar_lea.vmem [#allocation5], %s378
        // Predicated region
        $region41: #{tpu_custom_call.1} parent=35 // pred_check
          %p380 = pneg %p126
        $region42: #{tpu_custom_call.1} parent=35 // pred_check_branch
          %382 = sbr.rel (%p380) target = $region44
        $region43: #{tpu_custom_call.1} parent=35 // pred_region
          %s384 = ssub.s32 128, 128
          %385 = vsyncadd %s376, %s384
          %s386 = smul.addr %s19, 128
          %s387 = scalar_lea.hbm %s4, %s386
          %s389 = sshll.u32 %s379, 4
          %s390 = int_to_ptr.vmem [resolvable:$true] %s389
          %392 = dma.vmem_to_hbm [thread:$0]  %s390, 128, %s387, %s376
        $region44: #{tpu_custom_call.1} parent=35 // pred_fallthru
          _
      $region36: #{tpu_custom_call.1} parent=5 // pred_fallthru
        _
      %p393 = scmp.le.s32.totalorder 2, %s14
      // Predicated region
      $region45: #{tpu_custom_call.1} parent=5 // pred_check
        %p394 = pneg %p393
      $region46: #{tpu_custom_call.1} parent=5 // pred_check_branch
        %396 = sbr.rel (%p394) target = $region48
      $region47: #{tpu_custom_call.1} parent=5 // pred_region
        %s397 = ssub.s32 %s14, 2
        // Predicated region
        $region49: #{tpu_custom_call.1} parent=47 // pred_check
          %p398 = pneg %p132
        $region50: #{tpu_custom_call.1} parent=47 // pred_check_branch
          %400 = sbr.rel (%p398) target = $region52
        $region51: #{tpu_custom_call.1} parent=47 // pred_region
          %s401 = sand.u32 %s117, 1
          %s402 = scalar_lea.sflag [#allocation4], %s401
          %s403 = sand.u32 %s117, 1
          %s404 = smul.addr %s403, 8
          %s405 = scalar_lea.vmem [#allocation5], %s404
          %406 = dma.done %s402, 128
        $region52: #{tpu_custom_call.1} parent=47 // pred_fallthru
          _
      $region48: #{tpu_custom_call.1} parent=5 // pred_fallthru
        _
    $region6: #{tpu_custom_call.1} parent=1 // loop_footer
      %s18 = sadd.s32 1, %s14
    $region7: #{tpu_custom_call.1} parent=1 // loop_footer_branch
      %13 = sbr.rel target = $region3
    $region8: #{tpu_custom_call.1} parent=1 // loop_exit
      _
    %407 = vsyncpa [#allocation3], 1
    %s408 = scalar_lea.sflag [#allocation3], 1
    %409 = vsyncpa %s408, 1
    %410 = vsyncpa [#allocation4], 1
    %s411 = scalar_lea.sflag [#allocation4], 1
    %412 = vsyncpa %s411, 1

</llo_original>
